<compile_context>
chip_gen: v7x
topology: tpu7x:2x2x1
jax: 0.10.0
libtpu: 0.0.40
codegen_flags: <defaults>
</compile_context>

<pallas_src>
import functools
import math

import jax
import jax.numpy as jnp
from jax.experimental import pallas as pl
from jax.experimental.pallas import tpu as pltpu


def _dynamics_kernel(state_ref, w0_ref, b0_ref, w1_ref, b1_ref,
                     w2f_ref, b2f_ref, w2b_ref, b2b_ref,
                     f_ref, B_ref, *, act_dtype):
    s = state_ref[...]                                                  # (tb, n_in) f32
    # layer 0: f- and B-branch fc0 fused along the output axis, fully f32 (K is tiny).
    h0 = jnp.dot(s, w0_ref[...], preferred_element_type=jnp.float32) + b0_ref[...]
    h0 = jnp.tanh(h0.astype(act_dtype)).astype(jnp.bfloat16)           # (tb, 128)
    # layer 1: block-diagonal fusion of f_fc1 / B_fc1 -> one full-width MXU pass.
    h1 = jnp.dot(h0, w1_ref[...], preferred_element_type=jnp.float32) + b1_ref[...]
    h1 = jnp.tanh(h1.astype(act_dtype)).astype(jnp.bfloat16)           # (tb, 256)
    # layer 2: two narrow heads (lane-tile-aligned slices of h1) -> narrow stores,
    # no 128-lane zero padding, ~10x fewer output bytes to HBM.
    hf = h1[:, :128]
    hb = h1[:, 128:]
    f_ref[...] = (jnp.dot(hf, w2f_ref[...], preferred_element_type=jnp.float32)
                  + b2f_ref[...]).astype(f_ref.dtype)
    B_ref[...] = (jnp.dot(hb, w2b_ref[...], preferred_element_type=jnp.float32)
                  + b2b_ref[...]).astype(B_ref.dtype)


def _linear_init(key, fan_in, fan_out):
    """PyTorch nn.Linear default init: U(-1/sqrt(fan_in), 1/sqrt(fan_in)).
    Weights are stored transposed vs. PyTorch, i.e. (in_features, out_features)."""
    kw, kb = jax.random.split(key)
    bound = 1.0 / math.sqrt(fan_in)
    w = jax.random.uniform(kw, (fan_in, fan_out), jnp.float32, -bound, bound)
    b = jax.random.uniform(kb, (1, fan_out), jnp.float32, -bound, bound)
    return w, b


def init_params(key, n_state, m_control, n_extended_state=0):
    n_in = n_state + n_extended_state
    keys = jax.random.split(key, 6)
    wf0, bf0 = _linear_init(keys[0], n_in, 64)
    wf1, bf1 = _linear_init(keys[1], 64, 128)
    wf2, bf2 = _linear_init(keys[2], 128, n_state)
    wb0, bb0 = _linear_init(keys[3], n_in, 64)
    wb1, bb1 = _linear_init(keys[4], 64, 128)
    wb2, bb2 = _linear_init(keys[5], 128, n_state * m_control)
    return (wf0, bf0, wf1, bf1, wf2, bf2, wb0, bb0, wb1, bb1, wb2, bb2)


def pack_params(params, n_state, m_control):
    """Build the fused weight layout consumed by the kernel.
    Layer 0 stays f32 (exact input path); layers 1/2 are bf16 MXU operands."""
    (wf0, bf0, wf1, bf1, wf2, bf2, wb0, bb0, wb1, bb1, wb2, bb2) = params

    w0 = jnp.concatenate([wf0, wb0], axis=1)                  # (n_in, 128) f32
    b0 = jnp.concatenate([bf0, bb0], axis=1)                  # (1, 128)    f32

    w1 = jnp.zeros((128, 256), jnp.float32)                   # block-diagonal
    w1 = w1.at[:64, :128].set(wf1)
    w1 = w1.at[64:, 128:].set(wb1)
    b1 = jnp.concatenate([bf1, bb1], axis=1)                  # (1, 256)    f32

    return (w0, b0,
            w1.astype(jnp.bfloat16), b1,
            wf2.astype(jnp.bfloat16), bf2,                    # (128, n_state)
            wb2.astype(jnp.bfloat16), bb2)                    # (128, n_state*m_control)


def _round_up(x, m):
    return ((x + m - 1) // m) * m


def _tpu_kind():
    try:
        return jax.devices()[0].device_kind.lower()
    except Exception:
        return ""


def control_affine_dynamics(state, u, packed_params, n_state, m_control,
                            *, tile_b=1024, preprocess_func=None):
    """Returns (f, B) with f: (bs, n_state), B: (bs, n_state, m_control).
    `u` is accepted to match the PyTorch forward signature but, as in the
    reference module, is not used to compute f and B."""
    del u
    # TODO(synk): preprocess_func is an arbitrary Python callable in the PyTorch
    # module; it is applied here in the JAX wrapper (outside the kernel) when given.
    if preprocess_func is not None:
        state = preprocess_func(state)

    bs, n_in = state.shape
    w0, b0, w1, b1, w2f, b2f, w2b, b2b = packed_params

    kind = _tpu_kind()
    act_dtype = jnp.float32 if "v5" in kind else jnp.bfloat16   # v5e: no bf16 VPU/EUP
    two_cores = ("v7" in kind) or ("v4" in kind)                # 2 TensorCores / chip

    # Tile selection: large tiles so per-grid-step overhead is negligible; on
    # 2-TC chips cap at ~half the (padded) batch so both cores get grid steps.
    tile_b = _round_up(max(8, min(tile_b, _round_up(bs, 8))), 8)
    if two_cores and bs > 8:
        half = _round_up(max(1, _round_up(bs, 8) // 2), 8)
        tile_b = min(tile_b, max(8, half))
    n_tiles = pl.cdiv(bs, tile_b)
    bs_pad = n_tiles * tile_b
    if bs_pad != bs:
        state = jnp.pad(state, ((0, bs_pad - bs), (0, 0)))      # stays f32

    def const_spec(arr):
        return pl.BlockSpec(arr.shape, lambda i: (0, 0))        # VMEM-resident weights

    cp_kwargs = dict(dimension_semantics=("parallel",))
    if tile_b >= 2048:
        # Very large tiles on v5e can exceed the 16 MiB default scoped-VMEM limit.
        cp_kwargs["vmem_limit_bytes"] = 64 * 1024 * 1024

    f_pad, B_pad = pl.pallas_call(
        functools.partial(_dynamics_kernel, act_dtype=act_dtype),
        grid=(n_tiles,),
        in_specs=[
            pl.BlockSpec((tile_b, n_in), lambda i: (i, 0)),
            const_spec(w0), const_spec(b0),
            const_spec(w1), const_spec(b1),
            const_spec(w2f), const_spec(b2f),
            const_spec(w2b), const_spec(b2b),
        ],
        out_specs=(
            pl.BlockSpec((tile_b, n_state), lambda i: (i, 0)),
            pl.BlockSpec((tile_b, n_state * m_control), lambda i: (i, 0)),
        ),
        out_shape=(
            jax.ShapeDtypeStruct((bs_pad, n_state), jnp.float32),
            jax.ShapeDtypeStruct((bs_pad, n_state * m_control), jnp.float32),
        ),
        compiler_params=pltpu.CompilerParams(**cp_kwargs),
    )(state, w0, b0, w1, b1, w2f, b2f, w2b, b2b)

    f = f_pad if bs_pad == bs else f_pad[:bs]
    B_flat = B_pad if bs_pad == bs else B_pad[:bs]
    return f, B_flat.reshape(bs, n_state, m_control)


def _reference(state, params, n_state, m_control):
    """Pure-f32 reference matching the PyTorch forward."""
    (wf0, bf0, wf1, bf1, wf2, bf2, wb0, bb0, wb1, bb1, wb2, bb2) = params
    x = jnp.tanh(state @ wf0 + bf0)
    x = jnp.tanh(x @ wf1 + bf1)
    f = x @ wf2 + bf2
    y = jnp.tanh(state @ wb0 + bb0)
    y = jnp.tanh(y @ wb1 + bb1)
    B = (y @ wb2 + bb2).reshape(-1, n_state, m_control)
    return f, B


if __name__ == "__main__":
    n_state, m_control = 4, 2

    key = jax.random.PRNGKey(0)
    k_params, k_state, k_u, k_state2 = jax.random.split(key, 4)

    params = init_params(k_params, n_state, m_control)
    packed = pack_params(params, n_state, m_control)

    # --- small batch (single tile) ---
    bs = 8
    state = jax.random.normal(k_state, (bs, n_state), jnp.float32)
    u = jax.random.normal(k_u, (bs, m_control), jnp.float32)

    f, B = control_affine_dynamics(state, u, packed, n_state, m_control)
    f, B = jax.block_until_ready((f, B))

    f_ref, B_ref = _reference(state, params, n_state, m_control)
    assert f.shape == (bs, n_state)
    assert B.shape == (bs, n_state, m_control)
    # bf16 layer-1/2 operands (f32 accumulation, f32 layer 0) -> loosened tolerance.
    assert jnp.allclose(f, f_ref, atol=3e-2, rtol=3e-2)
    assert jnp.allclose(B, B_ref, atol=3e-2, rtol=3e-2)

    # --- larger batch exercising multiple tiles + remainder padding/masking ---
    bs2 = 272
    state2 = jax.random.normal(k_state2, (bs2, n_state), jnp.float32)
    u2 = jnp.zeros((bs2, m_control), jnp.float32)
    f2, B2 = control_affine_dynamics(state2, u2, packed, n_state, m_control,
                                     tile_b=128)
    f2, B2 = jax.block_until_ready((f2, B2))
    f2_ref, B2_ref = _reference(state2, params, n_state, m_control)
    assert f2.shape == (bs2, n_state)
    assert B2.shape == (bs2, n_state, m_control)
    assert jnp.allclose(f2, f2_ref, atol=3e-2, rtol=3e-2)
    assert jnp.allclose(B2, B2_ref, atol=3e-2, rtol=3e-2)

    print("KERNEL_OK")
</pallas_src>

<mosaic_0001>
module attributes {stable_mosaic.version = 11 : i64} {
  func.func @_dynamics_kernel(%arg0: i32, %arg1: memref<8x4xf32, #tpu.memory_space<vmem>>, %arg2: memref<4x128xf32, #tpu.memory_space<vmem>>, %arg3: memref<1x128xf32, #tpu.memory_space<vmem>>, %arg4: memref<128x256xbf16, #tpu.memory_space<vmem>>, %arg5: memref<1x256xf32, #tpu.memory_space<vmem>>, %arg6: memref<128x4xbf16, #tpu.memory_space<vmem>>, %arg7: memref<1x4xf32, #tpu.memory_space<vmem>>, %arg8: memref<128x8xbf16, #tpu.memory_space<vmem>>, %arg9: memref<1x8xf32, #tpu.memory_space<vmem>>, %arg10: memref<8x4xf32, #tpu.memory_space<vmem>>, %arg11: memref<8x8xf32, #tpu.memory_space<vmem>>) attributes {dimension_semantics = [#tpu.dimension_semantics<parallel>], iteration_bounds = array<i64: 1>, scalar_prefetch = 0 : i64, scratch_operands = 0 : i64, tpu.core_type = #tpu.core_type<tc>, window_params = [{transform_indices = @transform_0, window_bounds = array<i64: 8, 4>}, {pipeline_mode = #tpu.pipeline_mode<synchronous>, transform_indices = @transform_1, window_bounds = array<i64: 4, 128>}, {pipeline_mode = #tpu.pipeline_mode<synchronous>, transform_indices = @transform_2, window_bounds = array<i64: 1, 128>}, {pipeline_mode = #tpu.pipeline_mode<synchronous>, transform_indices = @transform_3, window_bounds = array<i64: 128, 256>}, {pipeline_mode = #tpu.pipeline_mode<synchronous>, transform_indices = @transform_4, window_bounds = array<i64: 1, 256>}, {pipeline_mode = #tpu.pipeline_mode<synchronous>, transform_indices = @transform_5, window_bounds = array<i64: 128, 4>}, {pipeline_mode = #tpu.pipeline_mode<synchronous>, transform_indices = @transform_6, window_bounds = array<i64: 1, 4>}, {pipeline_mode = #tpu.pipeline_mode<synchronous>, transform_indices = @transform_7, window_bounds = array<i64: 128, 8>}, {pipeline_mode = #tpu.pipeline_mode<synchronous>, transform_indices = @transform_8, window_bounds = array<i64: 1, 8>}, {transform_indices = @transform_9, window_bounds = array<i64: 8, 4>}, {transform_indices = @transform_10, window_bounds = array<i64: 8, 8>}]} {
    %c0 = arith.constant 0 : index
    %c0_0 = arith.constant 0 : index
    %0 = vector.load %arg1[%c0, %c0_0] : memref<8x4xf32, #tpu.memory_space<vmem>>, vector<8x4xf32>
    %c0_1 = arith.constant 0 : index
    %c0_2 = arith.constant 0 : index
    %1 = vector.load %arg2[%c0_1, %c0_2] : memref<4x128xf32, #tpu.memory_space<vmem>>, vector<4x128xf32>
    %cst = arith.constant dense<0.000000e+00> : vector<8x128xf32>
    %2 = tpu.matmul %0, %1, %cst {dimension_numbers = #tpu.dot_dimension_numbers<[1], [0], [0], [1], [0, 0, 1, 1], [], []>} : vector<8x4xf32>, vector<4x128xf32>, vector<8x128xf32> -> vector<8x128xf32>
    %c0_3 = arith.constant 0 : index
    %c0_4 = arith.constant 0 : index
    %3 = vector.load %arg3[%c0_3, %c0_4] : memref<1x128xf32, #tpu.memory_space<vmem>>, vector<1x128xf32>
    %4 = vector.broadcast %3 : vector<1x128xf32> to vector<8x128xf32>
    %5 = arith.addf %2, %4 : vector<8x128xf32>
    %6 = arith.truncf %5 : vector<8x128xf32> to vector<8x128xbf16>
    %7 = math.tanh %6 : vector<8x128xbf16>
    %c0_5 = arith.constant 0 : index
    %c0_6 = arith.constant 0 : index
    %8 = vector.load %arg4[%c0_5, %c0_6] : memref<128x256xbf16, #tpu.memory_space<vmem>>, vector<128x256xbf16>
    %cst_7 = arith.constant dense<0.000000e+00> : vector<8x256xf32>
    %9 = tpu.matmul %7, %8, %cst_7 {dimension_numbers = #tpu.dot_dimension_numbers<[1], [0], [0], [1], [0, 0, 1, 1], [], []>} : vector<8x128xbf16>, vector<128x256xbf16>, vector<8x256xf32> -> vector<8x256xf32>
    %c0_8 = arith.constant 0 : index
    %c0_9 = arith.constant 0 : index
    %10 = vector.load %arg5[%c0_8, %c0_9] : memref<1x256xf32, #tpu.memory_space<vmem>>, vector<1x256xf32>
    %11 = vector.broadcast %10 : vector<1x256xf32> to vector<8x256xf32>
    %12 = arith.addf %9, %11 : vector<8x256xf32>
    %13 = arith.truncf %12 : vector<8x256xf32> to vector<8x256xbf16>
    %14 = math.tanh %13 : vector<8x256xbf16>
    %15 = vector.extract_strided_slice %14 {offsets = [0, 0], sizes = [8, 128], strides = [1, 1]} : vector<8x256xbf16> to vector<8x128xbf16>
    %16 = vector.extract_strided_slice %14 {offsets = [0, 128], sizes = [8, 128], strides = [1, 1]} : vector<8x256xbf16> to vector<8x128xbf16>
    %c0_10 = arith.constant 0 : index
    %c0_11 = arith.constant 0 : index
    %17 = vector.load %arg6[%c0_10, %c0_11] : memref<128x4xbf16, #tpu.memory_space<vmem>>, vector<128x4xbf16>
    %cst_12 = arith.constant dense<0.000000e+00> : vector<8x4xf32>
    %18 = tpu.matmul %15, %17, %cst_12 {dimension_numbers = #tpu.dot_dimension_numbers<[1], [0], [0], [1], [0, 0, 1, 1], [], []>} : vector<8x128xbf16>, vector<128x4xbf16>, vector<8x4xf32> -> vector<8x4xf32>
    %c0_13 = arith.constant 0 : index
    %c0_14 = arith.constant 0 : index
    %19 = vector.load %arg7[%c0_13, %c0_14] : memref<1x4xf32, #tpu.memory_space<vmem>>, vector<1x4xf32>
    %20 = vector.broadcast %19 : vector<1x4xf32> to vector<8x4xf32>
    %21 = arith.addf %18, %20 : vector<8x4xf32>
    %c0_15 = arith.constant 0 : index
    %c0_16 = arith.constant 0 : index
    %22 = vector.load %arg10[%c0_15, %c0_16] : memref<8x4xf32, #tpu.memory_space<vmem>>, vector<8x4xf32>
    tpu.vector_store %arg10[%c0_15, %c0_16], %21 {strides = array<i32>} : memref<8x4xf32, #tpu.memory_space<vmem>>, vector<8x4xf32>,
    %c0_17 = arith.constant 0 : index
    %c0_18 = arith.constant 0 : index
    %23 = vector.load %arg8[%c0_17, %c0_18] : memref<128x8xbf16, #tpu.memory_space<vmem>>, vector<128x8xbf16>
    %cst_19 = arith.constant dense<0.000000e+00> : vector<8x8xf32>
    %24 = tpu.matmul %16, %23, %cst_19 {dimension_numbers = #tpu.dot_dimension_numbers<[1], [0], [0], [1], [0, 0, 1, 1], [], []>} : vector<8x128xbf16>, vector<128x8xbf16>, vector<8x8xf32> -> vector<8x8xf32>
    %c0_20 = arith.constant 0 : index
    %c0_21 = arith.constant 0 : index
    %25 = vector.load %arg9[%c0_20, %c0_21] : memref<1x8xf32, #tpu.memory_space<vmem>>, vector<1x8xf32>
    %26 = vector.broadcast %25 : vector<1x8xf32> to vector<8x8xf32>
    %27 = arith.addf %24, %26 : vector<8x8xf32>
    %c0_22 = arith.constant 0 : index
    %c0_23 = arith.constant 0 : index
    %28 = vector.load %arg11[%c0_22, %c0_23] : memref<8x8xf32, #tpu.memory_space<vmem>>, vector<8x8xf32>
    tpu.vector_store %arg11[%c0_22, %c0_23], %27 {strides = array<i32>} : memref<8x8xf32, #tpu.memory_space<vmem>>, vector<8x8xf32>,
    return
  }
  func.func @transform_0(%arg0: i32) -> (i32, i32) {
    %c0_i32 = arith.constant 0 : i32
    %c0_i32_0 = arith.constant 0 : i32
    return %arg0, %c0_i32 : i32, i32
  }
  func.func @transform_1(%arg0: i32) -> (i32, i32) {
    %c0_i32 = arith.constant 0 : i32
    %c0_i32_0 = arith.constant 0 : i32
    %c0_i32_1 = arith.constant 0 : i32
    return %c0_i32, %c0_i32_0 : i32, i32
  }
  func.func @transform_2(%arg0: i32) -> (i32, i32) {
    %c0_i32 = arith.constant 0 : i32
    %c0_i32_0 = arith.constant 0 : i32
    %c0_i32_1 = arith.constant 0 : i32
    return %c0_i32, %c0_i32_0 : i32, i32
  }
  func.func @transform_3(%arg0: i32) -> (i32, i32) {
    %c0_i32 = arith.constant 0 : i32
    %c0_i32_0 = arith.constant 0 : i32
    %c0_i32_1 = arith.constant 0 : i32
    return %c0_i32, %c0_i32_0 : i32, i32
  }
  func.func @transform_4(%arg0: i32) -> (i32, i32) {
    %c0_i32 = arith.constant 0 : i32
    %c0_i32_0 = arith.constant 0 : i32
    %c0_i32_1 = arith.constant 0 : i32
    return %c0_i32, %c0_i32_0 : i32, i32
  }
  func.func @transform_5(%arg0: i32) -> (i32, i32) {
    %c0_i32 = arith.constant 0 : i32
    %c0_i32_0 = arith.constant 0 : i32
    %c0_i32_1 = arith.constant 0 : i32
    return %c0_i32, %c0_i32_0 : i32, i32
  }
  func.func @transform_6(%arg0: i32) -> (i32, i32) {
    %c0_i32 = arith.constant 0 : i32
    %c0_i32_0 = arith.constant 0 : i32
    %c0_i32_1 = arith.constant 0 : i32
    return %c0_i32, %c0_i32_0 : i32, i32
  }
  func.func @transform_7(%arg0: i32) -> (i32, i32) {
    %c0_i32 = arith.constant 0 : i32
    %c0_i32_0 = arith.constant 0 : i32
    %c0_i32_1 = arith.constant 0 : i32
    return %c0_i32, %c0_i32_0 : i32, i32
  }
  func.func @transform_8(%arg0: i32) -> (i32, i32) {
    %c0_i32 = arith.constant 0 : i32
    %c0_i32_0 = arith.constant 0 : i32
    %c0_i32_1 = arith.constant 0 : i32
    return %c0_i32, %c0_i32_0 : i32, i32
  }
  func.func @transform_9(%arg0: i32) -> (i32, i32) {
    %c0_i32 = arith.constant 0 : i32
    %c0_i32_0 = arith.constant 0 : i32
    return %arg0, %c0_i32 : i32, i32
  }
  func.func @transform_10(%arg0: i32) -> (i32, i32) {
    %c0_i32 = arith.constant 0 : i32
    %c0_i32_0 = arith.constant 0 : i32
    return %arg0, %c0_i32 : i32, i32
  }
}

</mosaic_0001>

<llo_original>
// kernel: tpu_custom_call.1
$region0: #{tpu_custom_call.1}
  #allocation0 [shape = 'u32[]', space=smem, size = 0x4, offset = 0x4, fixed_abs, tag = 'smem constant byte address 0x4 - core index']
  #allocation1 [shape = 'u32[144,128]{1,0:T(1,128)}', space=vmem, size = 0x12000, scoped, tag = 'internal scratch']
  %s0 = inlined_call_operand.vmem [shape: f32[8,4], index: 0, kind: input, shape index: {}]
  %s1 = inlined_call_operand.vmem [shape: f32[4,128], index: 1, kind: input, shape index: {}]
  %s2 = inlined_call_operand.vmem [shape: f32[1,128], index: 2, kind: input, shape index: {}]
  %s3 = inlined_call_operand.vmem [shape: bf16[128,256], index: 3, kind: input, shape index: {}]
  %s4 = inlined_call_operand.vmem [shape: f32[1,256], index: 4, kind: input, shape index: {}]
  %s5 = inlined_call_operand.vmem [shape: bf16[128,4], index: 5, kind: input, shape index: {}]
  %s6 = inlined_call_operand.vmem [shape: f32[1,4], index: 6, kind: input, shape index: {}]
  %s7 = inlined_call_operand.vmem [shape: bf16[128,8], index: 7, kind: input, shape index: {}]
  %s8 = inlined_call_operand.vmem [shape: f32[1,8], index: 8, kind: input, shape index: {}]
  %s9 = inlined_call_operand.vmem [shape: f32[8,4], index: 9, kind: output, shape index: {0}]
  %s10 = inlined_call_operand.hbm [shape: f32[8,8], index: 10, kind: output, shape index: {1}]
  %11 = xla_tuple %s9, %s10
  %s12 = sld [smem:[#allocation0]]
  $region54: #{tpu_custom_call.1} parent=0
    _
  %s14 = ssub.s32 1, %s12
  %s15 = scalar_select 0, %s14, %s12
  $region1: #{tpu_custom_call.1} parent=0
    #allocation2 [shape = 'u8[4096]{0}', space=vmem, size = 0x1000, scoped, tag = 'output window, operand 1, single buffered']
    #allocation3 [shape = 's32[1]{0}', space=sflag, size = 0x4, scoped, tag = 'scoped memory for tpu_custom_call.1']
    %16 = vsyncpa [#allocation3], 0
    // Predicated region
    $region2: #{tpu_custom_call.1} parent=1 // pred_check
      _
    $region3: #{tpu_custom_call.1} parent=1 // pred_check_branch
      %18 = sbr.rel (0) target = $region5
    $region4: #{tpu_custom_call.1} parent=1 // pred_region
      _
    $region5: #{tpu_custom_call.1} parent=1 // pred_fallthru
      _
    // Predicated region
    $region6: #{tpu_custom_call.1} parent=1 // pred_check
      _
    $region7: #{tpu_custom_call.1} parent=1 // pred_check_branch
      %20 = sbr.rel (0) target = $region9
    $region8: #{tpu_custom_call.1} parent=1 // pred_region
      _
    $region9: #{tpu_custom_call.1} parent=1 // pred_fallthru
      _
    // Predicated region
    $region10: #{tpu_custom_call.1} parent=1 // pred_check
      _
    $region11: #{tpu_custom_call.1} parent=1 // pred_check_branch
      %22 = sbr.rel (0) target = $region13
    $region12: #{tpu_custom_call.1} parent=1 // pred_region
      _
    $region13: #{tpu_custom_call.1} parent=1 // pred_fallthru
      _
    // Predicated region
    $region14: #{tpu_custom_call.1} parent=1 // pred_check
      _
    $region15: #{tpu_custom_call.1} parent=1 // pred_check_branch
      %24 = sbr.rel (0) target = $region17
    $region16: #{tpu_custom_call.1} parent=1 // pred_region
      _
    $region17: #{tpu_custom_call.1} parent=1 // pred_fallthru
      _
    // Predicated region
    $region18: #{tpu_custom_call.1} parent=1 // pred_check
      _
    $region19: #{tpu_custom_call.1} parent=1 // pred_check_branch
      %26 = sbr.rel (0) target = $region21
    $region20: #{tpu_custom_call.1} parent=1 // pred_region
      _
    $region21: #{tpu_custom_call.1} parent=1 // pred_fallthru
      _
    // Predicated region
    $region22: #{tpu_custom_call.1} parent=1 // pred_check
      _
    $region23: #{tpu_custom_call.1} parent=1 // pred_check_branch
      %28 = sbr.rel (0) target = $region25
    $region24: #{tpu_custom_call.1} parent=1 // pred_region
      _
    $region25: #{tpu_custom_call.1} parent=1 // pred_fallthru
      _
    // Predicated region
    $region26: #{tpu_custom_call.1} parent=1 // pred_check
      _
    $region27: #{tpu_custom_call.1} parent=1 // pred_check_branch
      %30 = sbr.rel (0) target = $region29
    $region28: #{tpu_custom_call.1} parent=1 // pred_region
      _
    $region29: #{tpu_custom_call.1} parent=1 // pred_fallthru
      _
    // Predicated region
    $region30: #{tpu_custom_call.1} parent=1 // pred_check
      _
    $region31: #{tpu_custom_call.1} parent=1 // pred_check_branch
      %32 = sbr.rel (0) target = $region33
    $region32: #{tpu_custom_call.1} parent=1 // pred_region
      _
    $region33: #{tpu_custom_call.1} parent=1 // pred_fallthru
      _
    // Predicated region
    $region34: #{tpu_custom_call.1} parent=1 // pred_check
      _
    $region35: #{tpu_custom_call.1} parent=1 // pred_check_branch
      %34 = sbr.rel (0) target = $region37
    $region36: #{tpu_custom_call.1} parent=1 // pred_region
      _
    $region37: #{tpu_custom_call.1} parent=1 // pred_fallthru
      _
    %v36 = vld [vmem:[%s0] sm:$0xff]
    %v37 = vld [vmem:[%s1] sm:$0xf]
    %v38 = vld [vmem:[%s2] sm:$0x1]
    %v40 = vlaneseq
    %v41 = vshrl.u32 %v40, 7
    %v42 = vsub.s32 0, %v41
    %v43 = vrot.slane %v38, %v42
    %vm45 = vcmask 31744
    %v47 = vsel %vm45, %v36, 0
    %vm49 = vcmask 1043456
    %v51 = vsel %vm49, %v37, 0
    %53 = vmatprep.subr.mxu0 0.0
    %54 = vmatpush1.msra.mxu0 %v51
    %55 = vmatprep.subr.mxu0 0.0
    %56 = vmatpush1.msra.mxu0 0.0
    %57 = vmatprep.subr.mxu0 0.0
    %58 = vmatpush1.msra.mxu0 0.0
    %59 = vmatprep.subr.mxu0 0.0
    %60 = vmatpush1.msra.mxu0 0.0
    %61 = vmatprep.subr.mxu0 0.0
    %62 = vmatpush1.msra.mxu0 0.0
    %63 = vmatprep.subr.mxu0 0.0
    %64 = vmatpush1.msra.mxu0 0.0
    %65 = vmatprep.subr.mxu0 0.0
    %66 = vmatpush1.msra.mxu0 0.0
    %67 = vmatprep.subr.mxu0 0.0
    %68 = vmatpush1.msra.mxu0 0.0
    %69 = vmatprep.subr.mxu0 0.0
    %70 = vmatpush1.msra.mxu0 0.0
    %71 = vmatprep.subr.mxu0 0.0
    %72 = vmatpush1.msra.mxu0 0.0
    %73 = vmatprep.subr.mxu0 0.0
    %74 = vmatpush1.msra.mxu0 0.0
    %75 = vmatprep.subr.mxu0 0.0
    %76 = vmatpush1.msra.mxu0 0.0
    %77 = vmatprep.subr.mxu0 0.0
    %78 = vmatpush1.msra.mxu0 0.0
    %79 = vmatprep.subr.mxu0 0.0
    %80 = vmatpush1.msra.mxu0 0.0
    %81 = vmatprep.subr.mxu0 0.0
    %82 = vmatpush1.msra.mxu0 0.0
    %83 = vmatprep.subr.mxu0 0.0
    %84 = vmatpush1.msra.mxu0 0.0
    %85 = vmatprep.subr.mxu0 0.0
    %86 = vmatpush1.msra.mxu0 0.0
    %87 = vmatprep.subr.mxu0 0.0
    %88 = vmatpush1.msra.mxu0 0.0
    %89 = vmatprep.subr.mxu0 0.0
    %90 = vmatpush1.msra.mxu0 0.0
    %91 = vmatprep.subr.mxu0 0.0
    %92 = vmatpush1.msra.mxu0 0.0
    %93 = vmatprep.subr.mxu0 0.0
    %94 = vmatpush1.msra.mxu0 0.0
    %95 = vmatprep.subr.mxu0 0.0
    %96 = vmatpush1.msra.mxu0 0.0
    %97 = vmatprep.subr.mxu0 0.0
    %98 = vmatpush1.msra.mxu0 0.0
    %99 = vmatprep.subr.mxu0 0.0
    %100 = vmatpush1.msra.mxu0 0.0
    %101 = vmatprep.subr.mxu0 0.0
    %102 = vmatpush1.msra.mxu0 0.0
    %103 = vmatprep.subr.mxu0 0.0
    %104 = vmatpush1.msra.mxu0 0.0
    %105 = vmatprep.subr.mxu0 0.0
    %106 = vmatpush1.msra.mxu0 0.0
    %107 = vmatprep.subr.mxu0 0.0
    %108 = vmatpush1.msra.mxu0 0.0
    %109 = vmatprep.subr.mxu0 0.0
    %110 = vmatpush1.msra.mxu0 0.0
    %111 = vmatprep.subr.mxu0 0.0
    %112 = vmatpush1.msra.mxu0 0.0
    %113 = vmatprep.subr.mxu0 0.0
    %114 = vmatpush1.msra.mxu0 0.0
    %115 = vmatprep.subr.mxu0 0.0
    %116 = vmatpush1.msra.mxu0 0.0
    %117 = vmatprep.mubr.f32.mxu0 0.0
    %118 = vmatmul.mubr.f32.gmra.mrb[0].mxu0 %v47
    %v119 = vpop.f32.mrb[0].mxu0
    %v120 = vadd.f32 %v43, %v119
    %v121 = vpop.f32.mrb[0].mxu0
    %122 = vdwg.mxu0
    %v123 = vpack.c.bf16 %v120, %v120
    %v124 = vtanh.bf16.pop %v123
    %v125 = vld [vmem:[%s3] sm:$0xff]
    %v126 = vld [vmem:[%s3 + $0x8] sm:$0xff]
    %v127 = vld [vmem:[%s3 + $0x10] sm:$0xff]
    %v128 = vld [vmem:[%s3 + $0x18] sm:$0xff]
    %v129 = vld [vmem:[%s3 + $0x20] sm:$0xff]
    %v130 = vld [vmem:[%s3 + $0x28] sm:$0xff]
    %v131 = vld [vmem:[%s3 + $0x30] sm:$0xff]
    %v132 = vld [vmem:[%s3 + $0x38] sm:$0xff]
    %v133 = vld [vmem:[%s3 + $0x40] sm:$0xff]
    %v134 = vld [vmem:[%s3 + $0x48] sm:$0xff]
    %v135 = vld [vmem:[%s3 + $0x50] sm:$0xff]
    %v136 = vld [vmem:[%s3 + $0x58] sm:$0xff]
    %v137 = vld [vmem:[%s3 + $0x60] sm:$0xff]
    %v138 = vld [vmem:[%s3 + $0x68] sm:$0xff]
    %v139 = vld [vmem:[%s3 + $0x70] sm:$0xff]
    %v140 = vld [vmem:[%s3 + $0x78] sm:$0xff]
    %v141 = vld [vmem:[%s4] sm:$0x3]
    %v143 = vlaneseq
    %v144 = vshrl.u32 %v143, 7
    %v145 = vsub.s32 0, %v144
    %v146 = vrot.slane %v141, %v145
    %v147 = vlaneseq
    %v148 = vshrl.u32 %v147, 7
    %v149 = vsub.s32 1, %v148
    %v150 = vrot.slane %v141, %v149
    %v169 = vunpack.c.l.b16 %v125
    %v170 = vunpack.c.h.b16 %v125
    %v171 = vunpack.c.l.b16 %v126
    %v172 = vunpack.c.h.b16 %v126
    %v173 = vunpack.c.l.b16 %v127
    %v174 = vunpack.c.h.b16 %v127
    %v175 = vunpack.c.l.b16 %v128
    %v176 = vunpack.c.h.b16 %v128
    %v177 = vunpack.c.l.b16 %v129
    %v178 = vunpack.c.h.b16 %v129
    %v179 = vunpack.c.l.b16 %v130
    %v180 = vunpack.c.h.b16 %v130
    %v181 = vunpack.c.l.b16 %v131
    %v182 = vunpack.c.h.b16 %v131
    %v183 = vunpack.c.l.b16 %v132
    %v184 = vunpack.c.h.b16 %v132
    %v185 = vunpack.c.l.b16 %v133
    %v186 = vunpack.c.h.b16 %v133
    %v187 = vunpack.c.l.b16 %v134
    %v188 = vunpack.c.h.b16 %v134
    %v189 = vunpack.c.l.b16 %v135
    %v190 = vunpack.c.h.b16 %v135
    %v191 = vunpack.c.l.b16 %v136
    %v192 = vunpack.c.h.b16 %v136
    %v193 = vunpack.c.l.b16 %v137
    %v194 = vunpack.c.h.b16 %v137
    %v195 = vunpack.c.l.b16 %v138
    %v196 = vunpack.c.h.b16 %v138
    %v197 = vunpack.c.l.b16 %v139
    %v198 = vunpack.c.h.b16 %v139
    %v199 = vunpack.c.l.b16 %v140
    %v200 = vunpack.c.h.b16 %v140
    %v201 = vpack.c.b16 %v171, %v169
    %v202 = vpack.c.b16 %v172, %v170
    %v203 = vpack.c.b16 %v175, %v173
    %v204 = vpack.c.b16 %v176, %v174
    %v205 = vpack.c.b16 %v179, %v177
    %v206 = vpack.c.b16 %v180, %v178
    %v207 = vpack.c.b16 %v183, %v181
    %v208 = vpack.c.b16 %v184, %v182
    %v209 = vpack.c.b16 %v187, %v185
    %v210 = vpack.c.b16 %v188, %v186
    %v211 = vpack.c.b16 %v191, %v189
    %v212 = vpack.c.b16 %v192, %v190
    %v213 = vpack.c.b16 %v195, %v193
    %v214 = vpack.c.b16 %v196, %v194
    %v215 = vpack.c.b16 %v199, %v197
    %v216 = vpack.c.b16 %v200, %v198
    %233 = vmatprep.subr.bf16.mxu0 %v202
    %234 = vmatpush1.bf16.msra.mxu0 %v201
    %235 = vmatprep.subr.bf16.mxu0 %v204
    %236 = vmatpush1.bf16.msra.mxu0 %v203
    %237 = vmatprep.subr.bf16.mxu0 %v206
    %238 = vmatpush1.bf16.msra.mxu0 %v205
    %239 = vmatprep.subr.bf16.mxu0 %v208
    %240 = vmatpush1.bf16.msra.mxu0 %v207
    %241 = vmatprep.subr.bf16.mxu0 %v210
    %242 = vmatpush1.bf16.msra.mxu0 %v209
    %243 = vmatprep.subr.bf16.mxu0 %v212
    %244 = vmatpush1.bf16.msra.mxu0 %v211
    %245 = vmatprep.subr.bf16.mxu0 %v214
    %246 = vmatpush1.bf16.msra.mxu0 %v213
    %247 = vmatprep.subr.bf16.mxu0 %v216
    %248 = vmatpush1.bf16.msra.mxu0 %v215
    %249 = vmatprep.subr.bf16.mxu0 0
    %250 = vmatpush1.bf16.msra.mxu0 0
    %251 = vmatprep.subr.bf16.mxu0 0
    %252 = vmatpush1.bf16.msra.mxu0 0
    %253 = vmatprep.subr.bf16.mxu0 0
    %254 = vmatpush1.bf16.msra.mxu0 0
    %255 = vmatprep.subr.bf16.mxu0 0
    %256 = vmatpush1.bf16.msra.mxu0 0
    %257 = vmatprep.subr.bf16.mxu0 0
    %258 = vmatpush1.bf16.msra.mxu0 0
    %259 = vmatprep.subr.bf16.mxu0 0
    %260 = vmatpush1.bf16.msra.mxu0 0
    %261 = vmatprep.subr.bf16.mxu0 0
    %262 = vmatpush1.bf16.msra.mxu0 0
    %263 = vmatprep.subr.bf16.mxu0 0
    %264 = vmatpush1.bf16.msra.mxu0 0
    %265 = vmatprep.mubr.bf16.mxu0 0
    %266 = vmatmul.mubr.bf16.gmra.mrb[0].mxu0 %v124
    %v267 = vpop.f32.mrb[0].mxu0
    %v268 = vadd.f32 %v146, %v267
    %v269 = vpop.f32.mrb[0].mxu0
    %v270 = vadd.f32 %v150, %v269
    %v271 = vpop.f32.mrb[0].mxu0
    %v272 = vpop.f32.mrb[0].mxu0
    %273 = vdwg.mxu0
    %v274 = vpack.c.bf16 %v268, %v268
    %v275 = vpack.c.bf16 %v270, %v270
    %v276 = vtanh.bf16.pop %v274
    %v277 = vtanh.bf16.pop %v275
    %v278 = vld [vmem:[%s5] sm:$0xf]
    %v279 = vld [vmem:[%s5 + $0x4] sm:$0xf]
    %v280 = vld [vmem:[%s5 + $0x8] sm:$0xf]
    %v281 = vld [vmem:[%s5 + $0xc] sm:$0xf]
    %v282 = vld [vmem:[%s5 + $0x10] sm:$0xf]
    %v283 = vld [vmem:[%s5 + $0x14] sm:$0xf]
    %v284 = vld [vmem:[%s5 + $0x18] sm:$0xf]
    %v285 = vld [vmem:[%s5 + $0x1c] sm:$0xf]
    %v286 = vld [vmem:[%s5 + $0x20] sm:$0xf]
    %v287 = vld [vmem:[%s5 + $0x24] sm:$0xf]
    %v288 = vld [vmem:[%s5 + $0x28] sm:$0xf]
    %v289 = vld [vmem:[%s5 + $0x2c] sm:$0xf]
    %v290 = vld [vmem:[%s5 + $0x30] sm:$0xf]
    %v291 = vld [vmem:[%s5 + $0x34] sm:$0xf]
    %v292 = vld [vmem:[%s5 + $0x38] sm:$0xf]
    %v293 = vld [vmem:[%s5 + $0x3c] sm:$0xf]
    %v294 = vld [vmem:[%s6] sm:$0x1]
    %v296 = vlaneseq
    %v297 = vshrl.u32 %v296, 7
    %v298 = vsub.s32 0, %v297
    %v299 = vrot.slane %v294, %v298
    %v317 = vunpack.c.l.b16 %v278
    %v318 = vunpack.c.l.b16 %v279
    %v319 = vunpack.c.l.b16 %v280
    %v320 = vunpack.c.l.b16 %v281
    %v321 = vunpack.c.l.b16 %v282
    %v322 = vunpack.c.l.b16 %v283
    %v323 = vunpack.c.l.b16 %v284
    %v324 = vunpack.c.l.b16 %v285
    %v325 = vunpack.c.l.b16 %v286
    %v326 = vunpack.c.l.b16 %v287
    %v327 = vunpack.c.l.b16 %v288
    %v328 = vunpack.c.l.b16 %v289
    %v329 = vunpack.c.l.b16 %v290
    %v330 = vunpack.c.l.b16 %v291
    %v331 = vunpack.c.l.b16 %v292
    %v332 = vunpack.c.l.b16 %v293
    %v333 = vpack.c.b16 %v318, %v317
    %v334 = vpack.c.b16 %v320, %v319
    %v335 = vpack.c.b16 %v322, %v321
    %v336 = vpack.c.b16 %v324, %v323
    %v337 = vpack.c.b16 %v326, %v325
    %v338 = vpack.c.b16 %v328, %v327
    %v339 = vpack.c.b16 %v330, %v329
    %v340 = vpack.c.b16 %v332, %v331
    %349 = vmatprep.subr.bf16.mxu0 0
    %350 = vmatpush1.bf16.msra.mxu0 %v333
    %351 = vmatprep.subr.bf16.mxu0 0
    %352 = vmatpush1.bf16.msra.mxu0 %v334
    %353 = vmatprep.subr.bf16.mxu0 0
    %354 = vmatpush1.bf16.msra.mxu0 %v335
    %355 = vmatprep.subr.bf16.mxu0 0
    %356 = vmatpush1.bf16.msra.mxu0 %v336
    %357 = vmatprep.subr.bf16.mxu0 0
    %358 = vmatpush1.bf16.msra.mxu0 %v337
    %359 = vmatprep.subr.bf16.mxu0 0
    %360 = vmatpush1.bf16.msra.mxu0 %v338
    %361 = vmatprep.subr.bf16.mxu0 0
    %362 = vmatpush1.bf16.msra.mxu0 %v339
    %363 = vmatprep.subr.bf16.mxu0 0
    %364 = vmatpush1.bf16.msra.mxu0 %v340
    %365 = vmatprep.subr.bf16.mxu0 0
    %366 = vmatpush1.bf16.msra.mxu0 0
    %367 = vmatprep.subr.bf16.mxu0 0
    %368 = vmatpush1.bf16.msra.mxu0 0
    %369 = vmatprep.subr.bf16.mxu0 0
    %370 = vmatpush1.bf16.msra.mxu0 0
    %371 = vmatprep.subr.bf16.mxu0 0
    %372 = vmatpush1.bf16.msra.mxu0 0
    %373 = vmatprep.subr.bf16.mxu0 0
    %374 = vmatpush1.bf16.msra.mxu0 0
    %375 = vmatprep.subr.bf16.mxu0 0
    %376 = vmatpush1.bf16.msra.mxu0 0
    %377 = vmatprep.subr.bf16.mxu0 0
    %378 = vmatpush1.bf16.msra.mxu0 0
    %379 = vmatprep.subr.bf16.mxu0 0
    %380 = vmatpush1.bf16.msra.mxu0 0
    %381 = vmatprep.mubr.bf16.mxu0 0
    %382 = vmatmul.mubr.bf16.gmra.mrb[0].mxu0 %v276
    %v383 = vpop.f32.mrb[0].mxu0
    %v384 = vadd.f32 %v299, %v383
    %v385 = vpop.f32.mrb[0].mxu0
    %v386 = vpop.f32.mrb[0].mxu0
    %v387 = vpop.f32.mrb[0].mxu0
    %388 = vdwg.mxu0
    %389 = vst.msk [vmem:[%s9] sm:$0xff] %vm45, %v384
    %v390 = vld [vmem:[%s7] sm:$0xf]
    %v391 = vld [vmem:[%s7 + $0x4] sm:$0xf]
    %v392 = vld [vmem:[%s7 + $0x8] sm:$0xf]
    %v393 = vld [vmem:[%s7 + $0xc] sm:$0xf]
    %v394 = vld [vmem:[%s7 + $0x10] sm:$0xf]
    %v395 = vld [vmem:[%s7 + $0x14] sm:$0xf]
    %v396 = vld [vmem:[%s7 + $0x18] sm:$0xf]
    %v397 = vld [vmem:[%s7 + $0x1c] sm:$0xf]
    %v398 = vld [vmem:[%s7 + $0x20] sm:$0xf]
    %v399 = vld [vmem:[%s7 + $0x24] sm:$0xf]
    %v400 = vld [vmem:[%s7 + $0x28] sm:$0xf]
    %v401 = vld [vmem:[%s7 + $0x2c] sm:$0xf]
    %v402 = vld [vmem:[%s7 + $0x30] sm:$0xf]
    %v403 = vld [vmem:[%s7 + $0x34] sm:$0xf]
    %v404 = vld [vmem:[%s7 + $0x38] sm:$0xf]
    %v405 = vld [vmem:[%s7 + $0x3c] sm:$0xf]
    %v406 = vld [vmem:[%s8] sm:$0x1]
    %v408 = vlaneseq
    %v409 = vshrl.u32 %v408, 7
    %v410 = vsub.s32 0, %v409
    %v411 = vrot.slane %v406, %v410
    %v429 = vunpack.c.l.b16 %v390
    %v430 = vunpack.c.l.b16 %v391
    %v431 = vunpack.c.l.b16 %v392
    %v432 = vunpack.c.l.b16 %v393
    %v433 = vunpack.c.l.b16 %v394
    %v434 = vunpack.c.l.b16 %v395
    %v435 = vunpack.c.l.b16 %v396
    %v436 = vunpack.c.l.b16 %v397
    %v437 = vunpack.c.l.b16 %v398
    %v438 = vunpack.c.l.b16 %v399
    %v439 = vunpack.c.l.b16 %v400
    %v440 = vunpack.c.l.b16 %v401
    %v441 = vunpack.c.l.b16 %v402
    %v442 = vunpack.c.l.b16 %v403
    %v443 = vunpack.c.l.b16 %v404
    %v444 = vunpack.c.l.b16 %v405
    %v445 = vpack.c.b16 %v430, %v429
    %v446 = vpack.c.b16 %v432, %v431
    %v447 = vpack.c.b16 %v434, %v433
    %v448 = vpack.c.b16 %v436, %v435
    %v449 = vpack.c.b16 %v438, %v437
    %v450 = vpack.c.b16 %v440, %v439
    %v451 = vpack.c.b16 %v442, %v441
    %v452 = vpack.c.b16 %v444, %v443
    %461 = vmatprep.subr.bf16.mxu0 0
    %462 = vmatpush1.bf16.msra.mxu0 %v445
    %463 = vmatprep.subr.bf16.mxu0 0
    %464 = vmatpush1.bf16.msra.mxu0 %v446
    %465 = vmatprep.subr.bf16.mxu0 0
    %466 = vmatpush1.bf16.msra.mxu0 %v447
    %467 = vmatprep.subr.bf16.mxu0 0
    %468 = vmatpush1.bf16.msra.mxu0 %v448
    %469 = vmatprep.subr.bf16.mxu0 0
    %470 = vmatpush1.bf16.msra.mxu0 %v449
    %471 = vmatprep.subr.bf16.mxu0 0
    %472 = vmatpush1.bf16.msra.mxu0 %v450
    %473 = vmatprep.subr.bf16.mxu0 0
    %474 = vmatpush1.bf16.msra.mxu0 %v451
    %475 = vmatprep.subr.bf16.mxu0 0
    %476 = vmatpush1.bf16.msra.mxu0 %v452
    %477 = vmatprep.subr.bf16.mxu0 0
    %478 = vmatpush1.bf16.msra.mxu0 0
    %479 = vmatprep.subr.bf16.mxu0 0
    %480 = vmatpush1.bf16.msra.mxu0 0
    %481 = vmatprep.subr.bf16.mxu0 0
    %482 = vmatpush1.bf16.msra.mxu0 0
    %483 = vmatprep.subr.bf16.mxu0 0
    %484 = vmatpush1.bf16.msra.mxu0 0
    %485 = vmatprep.subr.bf16.mxu0 0
    %486 = vmatpush1.bf16.msra.mxu0 0
    %487 = vmatprep.subr.bf16.mxu0 0
    %488 = vmatpush1.bf16.msra.mxu0 0
    %489 = vmatprep.subr.bf16.mxu0 0
    %490 = vmatpush1.bf16.msra.mxu0 0
    %491 = vmatprep.subr.bf16.mxu0 0
    %492 = vmatpush1.bf16.msra.mxu0 0
    %493 = vmatprep.mubr.bf16.mxu0 0
    %494 = vmatmul.mubr.bf16.gmra.mrb[0].mxu0 %v277
    %v495 = vpop.f32.mrb[0].mxu0
    %v496 = vadd.f32 %v411, %v495
    %v497 = vpop.f32.mrb[0].mxu0
    %v498 = vpop.f32.mrb[0].mxu0
    %v499 = vpop.f32.mrb[0].mxu0
    %500 = vdwg.mxu0
    %vm501 = vcmask 64512
    %502 = vst.msk [vmem:[#allocation2] sm:$0xff] %vm501, %v496
    // Predicated region
    $region38: #{tpu_custom_call.1} parent=1 // pred_check
      _
    $region39: #{tpu_custom_call.1} parent=1 // pred_check_branch
      %504 = sbr.rel (0) target = $region41
    $region40: #{tpu_custom_call.1} parent=1 // pred_region
      _
    $region41: #{tpu_custom_call.1} parent=1 // pred_fallthru
      _
    // Predicated region
    $region42: #{tpu_custom_call.1} parent=1 // pred_check
      _
    $region43: #{tpu_custom_call.1} parent=1 // pred_check_branch
      %506 = sbr.rel (0) target = $region45
    $region44: #{tpu_custom_call.1} parent=1 // pred_region
      %s508 = ssub.s32 128, 128
      %509 = vsyncadd [#allocation3], %s508
      %s511 = sshll.u32 [#allocation2], 4
      %s512 = int_to_ptr.vmem [resolvable:$true] %s511
      %514 = dma.vmem_to_hbm [thread:$0]  %s512, 128, %s10, [#allocation3]
    $region45: #{tpu_custom_call.1} parent=1 // pred_fallthru
      _
    // Predicated region
    $region46: #{tpu_custom_call.1} parent=1 // pred_check
      _
    $region47: #{tpu_custom_call.1} parent=1 // pred_check_branch
      %516 = sbr.rel (0) target = $region49
    $region48: #{tpu_custom_call.1} parent=1 // pred_region
      _
    $region49: #{tpu_custom_call.1} parent=1 // pred_fallthru
      _
    // Predicated region
    $region50: #{tpu_custom_call.1} parent=1 // pred_check
      _
    $region51: #{tpu_custom_call.1} parent=1 // pred_check_branch
      %518 = sbr.rel (0) target = $region53
    $region52: #{tpu_custom_call.1} parent=1 // pred_region
      %519 = dma.done [#allocation3], 128
    $region53: #{tpu_custom_call.1} parent=1 // pred_fallthru
      _
    %520 = vsyncpa [#allocation3], 1

</llo_original>
